<compile_context>
chip_gen: v6e
topology: v6e:2x2x1
jax: 0.10.0
libtpu: 0.0.40
codegen_flags: <defaults>
</compile_context>

<pallas_src>
import functools

import jax
import jax.numpy as jnp
from jax.experimental import pallas as pl
from jax.experimental.pallas import tpu as pltpu


def _margin_loss_kernel(margin_ref, *refs, has_weights, num_rows, row_block,
                        blocks_per_part, inv_denom):
    """One (row_block, W) tile: hinge scores -> row mask -> scalar accumulate."""
    if has_weights:
        p_ref, n_ref, w_ref, out_ref = refs
    else:
        p_ref, n_ref, out_ref = refs
        w_ref = None

    c = pl.program_id(0)          # TensorCore / part index ("parallel")
    i = pl.program_id(1)          # row-block index within the part ("arbitrary")

    @pl.when(i == 0)
    def _():
        out_ref[...] = jnp.zeros_like(out_ref)

    margin = margin_ref[0, 0]
    p = p_ref[...].astype(jnp.float32)
    n = n_ref[...].astype(jnp.float32)
    scores = jnp.maximum(margin - p + n, 0.0)
    if w_ref is not None:
        scores = w_ref[...].astype(jnp.float32) * scores

    # Mask rows past the logical end: the ragged last block reads garbage in
    # its out-of-bounds rows, and redundant (clamped) blocks on the multi-core
    # split must contribute nothing.  jnp.where is a select, so NaN/Inf in the
    # unselected garbage never propagates.
    row0 = (c * blocks_per_part + i) * row_block
    rows = row0 + jax.lax.broadcasted_iota(jnp.int32, scores.shape, 0)
    scores = jnp.where(rows < num_rows, scores, 0.0)

    out_ref[...] += jnp.sum(scores)

    @pl.when(i == pl.num_programs(1) - 1)
    def _():
        out_ref[...] *= inv_denom


def _vmem_capacity_bytes():
    try:
        cap = int(getattr(pltpu.get_tpu_info(), "vmem_capacity_bytes", 0))
        if cap > 0:
            return cap
    except Exception:
        pass
    return 128 * 1024 * 1024      # v5e/v6e default if the query is unavailable


def _num_parts():
    """2-way split only on chips with 2 TensorCores per JAX device."""
    # TODO(synk): on v7x verify via xprof that plain "parallel" shards across
    # both TensorCores; if not, switch to pltpu.CORE_PARALLEL / pl.core_map.
    try:
        kind = jax.devices()[0].device_kind.lower()
    except Exception:
        return 1
    if any(tag in kind for tag in ("v4", "v5p", "v5 p", "7x", "v7")):
        return 2
    return 1                      # v5e / v5 lite / v6e: single TensorCore


def _lane_dense_view(B, K):
    """(B, K) -> (M, W) with W a multiple of 128 when the reshape is free."""
    N = B * K
    for W in (4096, 2048, 1024, 512, 384, 256, 128):
        if W <= N and N % W == 0:
            return N // W, W
    # TODO(synk): when B*K % 128 != 0 we fall back to full-K row blocks, which
    # wastes lanes for K % 128 != 0 and could exceed VMEM for pathologically
    # wide ragged K (would need a padded flat layout or manual DMA).
    return B, K


def _choose_tile_rows(num_rows, row_width, itemsizes, sublane_mult):
    """Rows per block: as big as the VMEM budget allows (double-buffered)."""
    cap = _vmem_capacity_bytes()
    if cap < 100 * 1024 * 1024:
        # v7x-class: 64 MiB VMEM per TC but 3.2 TB/s HBM -> bigger tiles keep
        # the ~0.35 us per-grid-step overhead amortized.
        budget, per_tile_cap = cap // 2, 8 * 1024 * 1024
    else:
        # v5e / v6e: 128 MiB VMEM; slower HBM already amortizes ~4 MiB tiles.
        budget, per_tile_cap = cap // 4, 4 * 1024 * 1024
    bytes_per_row_all = row_width * sum(itemsizes)        # one row of every tiled input
    tb = budget // max(2 * bytes_per_row_all, 1)          # x2 for double buffering
    tb = min(tb, per_tile_cap // max(row_width * max(itemsizes), 1))
    if tb >= num_rows or sublane_mult >= num_rows:
        return num_rows                                   # one block, full row dim
    return max(sublane_mult, (tb // sublane_mult) * sublane_mult)


@jax.jit
def margin_ranking_loss(p_scores, n_scores, weights=None, *, margin=1.0):
    """Pallas implementation of MarginRankingLoss.forward. Returns scalar f32."""
    assert p_scores.shape == n_scores.shape
    if weights is not None:
        assert weights.shape == p_scores.shape

    B, K = p_scores.shape
    M, W = _lane_dense_view(B, K)

    args = [p_scores.reshape(M, W), n_scores.reshape(M, W)]   # native dtype, free reshape
    if weights is not None:
        args.append(weights.reshape(M, W))

    itemsizes = [a.dtype.itemsize for a in args]
    sublane_mult = max(8 * max(1, 4 // it) for it in itemsizes)   # f32:8  bf16:16  8-bit:32
    tb = _choose_tile_rows(M, W, itemsizes, sublane_mult)

    total_blocks = -(-M // tb)
    num_parts = min(_num_parts(), total_blocks)
    bpp = -(-total_blocks // num_parts)                    # row blocks per part

    inv_denom = 1.0 / float(B * K)                         # mean over the ORIGINAL count
    margin_arr = jnp.full((1, 1), margin, jnp.float32)

    if num_parts == 1:
        tile_map = lambda c, i: (i, 0)
    else:
        # Clamp redundant trailing blocks of the last part to a valid block;
        # the in-kernel row mask zeroes their contribution.
        tile_map = lambda c, i: (jnp.minimum(c * bpp + i, total_blocks - 1), 0)

    in_specs = [pl.BlockSpec((1, 1), lambda c, i: (0, 0), memory_space=pltpu.SMEM)]
    in_specs += [pl.BlockSpec((tb, W), tile_map) for _ in args]
    out_spec = pl.BlockSpec((1, 1), lambda c, i: (c, 0))   # resident VMEM accumulator

    kernel = functools.partial(
        _margin_loss_kernel,
        has_weights=weights is not None,
        num_rows=M, row_block=tb, blocks_per_part=bpp, inv_denom=inv_denom)

    tile_bytes = tb * W * sum(itemsizes)
    vmem_limit = int(min(_vmem_capacity_bytes(),
                         max(3 * tile_bytes, 32 * 1024 * 1024)))

    n_elems = M * W
    cost = pl.CostEstimate(flops=(5 if weights is not None else 4) * n_elems,
                           transcendentals=0,
                           bytes_accessed=n_elems * sum(itemsizes) + 8 * num_parts)

    partials = pl.pallas_call(
        kernel,
        out_shape=jax.ShapeDtypeStruct((num_parts, 1), jnp.float32),
        grid=(num_parts, bpp),
        in_specs=in_specs,
        out_specs=out_spec,
        compiler_params=pltpu.CompilerParams(
            dimension_semantics=("parallel", "arbitrary"),
            vmem_limit_bytes=vmem_limit),
        cost_estimate=cost,
    )(margin_arr, *args)
    return jnp.sum(partials)


if __name__ == "__main__":
    keys = jax.random.split(jax.random.PRNGKey(0), 8)

    # Case 1: lane-aligned f32 (batch=8, negatives-per-example=128).
    B, K = 8, 128
    p1 = jax.random.normal(keys[0], (B, K), dtype=jnp.float32)
    n1 = jax.random.normal(keys[1], (B, K), dtype=jnp.float32)
    w1 = jax.random.uniform(keys[2], (B, K), dtype=jnp.float32)
    loss1 = margin_ranking_loss(p1, n1, margin=1.0)
    loss1w = margin_ranking_loss(p1, n1, w1, margin=1.0)
    jax.block_until_ready((loss1, loss1w))
    ref1 = jnp.mean(jnp.maximum(1.0 - p1 + n1, 0.0))
    ref1w = jnp.mean(w1 * jnp.maximum(1.0 - p1 + n1, 0.0))
    assert jnp.allclose(loss1, ref1, rtol=1e-5, atol=1e-6), (loss1, ref1)
    assert jnp.allclose(loss1w, ref1w, rtol=1e-5, atol=1e-6), (loss1w, ref1w)

    # Case 2: ragged batch + K not a multiple of 128 (in-kernel row mask,
    # full-K fallback layout), different margin value (no recompile needed).
    B2, K2 = 13, 96
    p2 = jax.random.normal(keys[3], (B2, K2), dtype=jnp.float32)
    n2 = jax.random.normal(keys[4], (B2, K2), dtype=jnp.float32)
    w2 = jax.random.uniform(keys[5], (B2, K2), dtype=jnp.float32)
    loss2 = margin_ranking_loss(p2, n2, w2, margin=0.5)
    jax.block_until_ready(loss2)
    ref2 = jnp.mean(w2 * jnp.maximum(0.5 - p2 + n2, 0.0))
    assert jnp.allclose(loss2, ref2, rtol=1e-5, atol=1e-6), (loss2, ref2)

    # Case 3: native bf16 scores streamed without any wrapper upcast.
    B3, K3 = 16, 256
    p3 = jax.random.normal(keys[6], (B3, K3), dtype=jnp.bfloat16)
    n3 = jax.random.normal(keys[7], (B3, K3), dtype=jnp.bfloat16)
    loss3 = margin_ranking_loss(p3, n3, margin=1.0)
    jax.block_until_ready(loss3)
    ref3 = jnp.mean(jnp.maximum(
        1.0 - p3.astype(jnp.float32) + n3.astype(jnp.float32), 0.0))
    assert jnp.allclose(loss3, ref3, rtol=1e-5, atol=1e-6), (loss3, ref3)

    print("KERNEL_OK")
</pallas_src>

<mosaic_0001>
module attributes {stable_mosaic.version = 11 : i64} {
  func.func @_margin_loss_kernel(%arg0: i32, %arg1: i32, %arg2: memref<1x1xf32, #tpu.memory_space<smem>>, %arg3: memref<1x1024xf32, #tpu.memory_space<vmem>>, %arg4: memref<1x1024xf32, #tpu.memory_space<vmem>>, %arg5: memref<1x1xf32, #tpu.memory_space<vmem>>) attributes {dimension_semantics = [#tpu.dimension_semantics<parallel>, #tpu.dimension_semantics<arbitrary>], iteration_bounds = array<i64: 1, 1>, scalar_prefetch = 0 : i64, scratch_operands = 0 : i64, tpu.core_type = #tpu.core_type<tc>, window_params = [{transform_indices = @transform_0, window_bounds = array<i64: 1, 1>}, {transform_indices = @transform_1, window_bounds = array<i64: 1, 1024>}, {transform_indices = @transform_2, window_bounds = array<i64: 1, 1024>}, {transform_indices = @transform_3, window_bounds = array<i64: 1, 1>}]} {
    %c0_i32 = arith.constant 0 : i32
    %0 = arith.cmpi eq, %arg1, %c0_i32 : i32
    %1 = arith.extui %0 : i1 to i32
    %c0_i32_0 = arith.constant 0 : i32
    %2 = arith.cmpi ne, %1, %c0_i32_0 : i32
    scf.if %2 {
      %cst_16 = arith.constant 0.000000e+00 : f32
      %32 = vector.broadcast %cst_16 : f32 to vector<1x1xf32>
      %c0_17 = arith.constant 0 : index
      %c0_18 = arith.constant 0 : index
      %33 = vector.load %arg5[%c0_17, %c0_18] : memref<1x1xf32, #tpu.memory_space<vmem>>, vector<1x1xf32>
      tpu.vector_store %arg5[%c0_17, %c0_18], %32 {strides = array<i32>} : memref<1x1xf32, #tpu.memory_space<vmem>>, vector<1x1xf32>,
    } else {
    }
    %c0 = arith.constant 0 : index
    %c0_1 = arith.constant 0 : index
    %3 = memref.load %arg2[%c0, %c0_1] : memref<1x1xf32, #tpu.memory_space<smem>>
    %c0_2 = arith.constant 0 : index
    %c0_3 = arith.constant 0 : index
    %4 = vector.load %arg3[%c0_2, %c0_3] : memref<1x1024xf32, #tpu.memory_space<vmem>>, vector<1x1024xf32>
    %c0_4 = arith.constant 0 : index
    %c0_5 = arith.constant 0 : index
    %5 = vector.load %arg4[%c0_4, %c0_5] : memref<1x1024xf32, #tpu.memory_space<vmem>>, vector<1x1024xf32>
    %6 = vector.broadcast %3 : f32 to vector<1x1024xf32>
    %7 = arith.subf %6, %4 : vector<1x1024xf32>
    %8 = arith.addf %7, %5 : vector<1x1024xf32>
    %cst = arith.constant 0.000000e+00 : f32
    %9 = vector.broadcast %cst : f32 to vector<1x1024xf32>
    %10 = arith.maximumf %8, %9 : vector<1x1024xf32>
    %c1_i32 = arith.constant 1 : i32
    %11 = arith.muli %arg0, %c1_i32 : i32
    %12 = arith.addi %11, %arg1 : i32
    %c1_i32_6 = arith.constant 1 : i32
    %13 = arith.muli %12, %c1_i32_6 : i32
    %14 = tpu.iota {dimensions = array<i32: 0>} : vector<1x1024xi32>
    %15 = vector.broadcast %13 : i32 to vector<1x1024xi32>
    %16 = arith.addi %15, %14 : vector<1x1024xi32>
    %c1_i32_7 = arith.constant 1 : i32
    %17 = vector.broadcast %c1_i32_7 : i32 to vector<1x1024xi32>
    %18 = arith.cmpi slt, %16, %17 : vector<1x1024xi32>
    %cst_8 = arith.constant 0.000000e+00 : f32
    %19 = vector.broadcast %cst_8 : f32 to vector<1x1024xf32>
    %20 = arith.select %18, %10, %19 : vector<1x1024xi1>, vector<1x1024xf32>
    %c0_9 = arith.constant 0 : index
    %c0_10 = arith.constant 0 : index
    %21 = vector.load %arg5[%c0_9, %c0_10] : memref<1x1xf32, #tpu.memory_space<vmem>>, vector<1x1xf32>
    %22 = vector.shape_cast %20 : vector<1x1024xf32> to vector<1x1x1024xf32>
    %cst_11 = arith.constant dense<0.000000e+00> : vector<1xf32>
    %23 = vector.multi_reduction <add>, %22, %cst_11 [1, 2] : vector<1x1x1024xf32> to vector<1xf32>
    %24 = vector.shape_cast %23 : vector<1xf32> to vector<1x1x1xf32>
    %25 = vector.extract %24[0, 0, 0] : f32 from vector<1x1x1xf32>
    %26 = vector.broadcast %25 : f32 to vector<1x1xf32>
    %27 = arith.addf %21, %26 : vector<1x1xf32>
    %c0_12 = arith.constant 0 : index
    %c0_13 = arith.constant 0 : index
    %28 = vector.load %arg5[%c0_12, %c0_13] : memref<1x1xf32, #tpu.memory_space<vmem>>, vector<1x1xf32>
    tpu.vector_store %arg5[%c0_12, %c0_13], %27 {strides = array<i32>} : memref<1x1xf32, #tpu.memory_space<vmem>>, vector<1x1xf32>,
    %c0_i32_14 = arith.constant 0 : i32
    %29 = arith.cmpi eq, %arg1, %c0_i32_14 : i32
    %30 = arith.extui %29 : i1 to i32
    %c0_i32_15 = arith.constant 0 : i32
    %31 = arith.cmpi ne, %30, %c0_i32_15 : i32
    scf.if %31 {
      %c0_16 = arith.constant 0 : index
      %c0_17 = arith.constant 0 : index
      %32 = vector.load %arg5[%c0_16, %c0_17] : memref<1x1xf32, #tpu.memory_space<vmem>>, vector<1x1xf32>
      %cst_18 = arith.constant 9.765625E-4 : f32
      %33 = vector.broadcast %cst_18 : f32 to vector<1x1xf32>
      %34 = arith.mulf %32, %33 : vector<1x1xf32>
      %c0_19 = arith.constant 0 : index
      %c0_20 = arith.constant 0 : index
      %35 = vector.load %arg5[%c0_19, %c0_20] : memref<1x1xf32, #tpu.memory_space<vmem>>, vector<1x1xf32>
      tpu.vector_store %arg5[%c0_19, %c0_20], %34 {strides = array<i32>} : memref<1x1xf32, #tpu.memory_space<vmem>>, vector<1x1xf32>,
    } else {
    }
    return
  }
  func.func @transform_0(%arg0: i32, %arg1: i32) -> (i32, i32) {
    %c0_i32 = arith.constant 0 : i32
    %c0_i32_0 = arith.constant 0 : i32
    %c0_i32_1 = arith.constant 0 : i32
    return %c0_i32, %c0_i32_0 : i32, i32
  }
  func.func @transform_1(%arg0: i32, %arg1: i32) -> (i32, i32) {
    %c0_i32 = arith.constant 0 : i32
    %c0_i32_0 = arith.constant 0 : i32
    return %arg1, %c0_i32 : i32, i32
  }
  func.func @transform_2(%arg0: i32, %arg1: i32) -> (i32, i32) {
    %c0_i32 = arith.constant 0 : i32
    %c0_i32_0 = arith.constant 0 : i32
    return %arg1, %c0_i32 : i32, i32
  }
  func.func @transform_3(%arg0: i32, %arg1: i32) -> (i32, i32) {
    %c0_i32 = arith.constant 0 : i32
    %c0_i32_0 = arith.constant 0 : i32
    return %arg0, %c0_i32 : i32, i32
  }
}

</mosaic_0001>

<llo_original>
// kernel: margin_ranking_loss.1
$region0: #{margin_ranking_loss.1}
  #allocation0 [shape = 'u32[]', space=smem, size = 0x4, offset = 0x4, fixed_abs, tag = 'smem constant byte address 0x4 - core index']
  #allocation1 [shape = 'u32[144,128]{1,0:T(1,128)}', space=vmem, size = 0x12000, scoped, tag = 'internal scratch']
  #allocation2 [shape = 'f32[1,1]{1,0:T(1,128)S(6)}', space=smem, size = 0x200, scoped, tag = 'scoped memory for margin_ranking_loss.1']
  %s0 = inlined_call_operand.<no memory space> [shape: f32[1,1], index: 0, kind: input, shape index: {}]
  %s1 = inlined_call_operand.hbm [shape: f32[1,1024], index: 1, kind: input, shape index: {}]
  %s2 = inlined_call_operand.vmem [shape: f32[1,1024], index: 2, kind: input, shape index: {}]
  %s3 = inlined_call_operand.hbm [shape: f32[1,1], index: 3, kind: output, shape index: {}]
  %s4 = sld [smem:[#allocation0]]
  $region34: #{margin_ranking_loss.1} parent=0
    _
  %s6 = ssub.s32 1, %s4
  %s7 = scalar_select 0, %s6, %s4
  %8 = sst [smem:[#allocation2]] %s0
  $region1: #{margin_ranking_loss.1} parent=0
    #allocation3 [shape = 'u8[4096]{0}', space=vmem, size = 0x1000, scoped, tag = 'input window, operand 1, single buffered']
    #allocation4 [shape = 's32[1]{0}', space=sflag, size = 0x4, scoped, tag = 'scoped memory for margin_ranking_loss.1']
    #allocation5 [shape = 's32[1]{0}', space=sflag, size = 0x4, scoped, tag = 'scoped memory for margin_ranking_loss.1']
    #allocation6 [shape = 'u8[512]{0}', space=vmem, size = 0x400, scoped, tag = 'output window, operand 0, single buffered']
    %9 = vsyncpa [#allocation4], 0
    %10 = vsyncpa [#allocation5], 0
    // Predicated region
    $region2: #{margin_ranking_loss.1} parent=1 // pred_check
      _
    $region3: #{margin_ranking_loss.1} parent=1 // pred_check_branch
      %12 = sbr.rel (0) target = $region5
    $region4: #{margin_ranking_loss.1} parent=1 // pred_region
      _
    $region5: #{margin_ranking_loss.1} parent=1 // pred_fallthru
      _
    // Predicated region
    $region6: #{margin_ranking_loss.1} parent=1 // pred_check
      _
    $region7: #{margin_ranking_loss.1} parent=1 // pred_check_branch
      %14 = sbr.rel (0) target = $region9
    $region8: #{margin_ranking_loss.1} parent=1 // pred_region
      %s16 = ssub.s32 128, 128
      %17 = vsyncadd [#allocation4], %s16
      %s19 = sshll.u32 [#allocation3], 4
      %s20 = int_to_ptr.vmem [resolvable:$true] %s19
      %22 = dma.hbm_to_vmem [thread:$0]  %s1, 128, %s20, [#allocation4]
    $region9: #{margin_ranking_loss.1} parent=1 // pred_fallthru
      _
    // Predicated region
    $region10: #{margin_ranking_loss.1} parent=1 // pred_check
      _
    $region11: #{margin_ranking_loss.1} parent=1 // pred_check_branch
      %24 = sbr.rel (0) target = $region13
    $region12: #{margin_ranking_loss.1} parent=1 // pred_region
      _
    $region13: #{margin_ranking_loss.1} parent=1 // pred_fallthru
      _
    // Predicated region
    $region14: #{margin_ranking_loss.1} parent=1 // pred_check
      _
    $region15: #{margin_ranking_loss.1} parent=1 // pred_check_branch
      %26 = sbr.rel (0) target = $region17
    $region16: #{margin_ranking_loss.1} parent=1 // pred_region
      %27 = dma.done [#allocation4], 128
    $region17: #{margin_ranking_loss.1} parent=1 // pred_fallthru
      _
    %p28 = scmp.eq.s32.totalorder 0, 0
    // Predicated region
    $region18: #{margin_ranking_loss.1} parent=1 // pred_check
      %p29 = pneg %p28
    $region19: #{margin_ranking_loss.1} parent=1 // pred_check_branch
      %31 = sbr.rel (%p29) target = $region21
    $region20: #{margin_ranking_loss.1} parent=1 // pred_region
      %vm32 = vcmask 0
      %33 = vst.msk [vmem:[#allocation6] sm:$0x1] %vm32, 0.0
    $region21: #{margin_ranking_loss.1} parent=1 // pred_fallthru
      _
    %s34 = sld [smem:[#allocation2]]
    %v35 = vld [vmem:[#allocation3] sm:$0xff]
    %v36 = vld [vmem:[%s2] sm:$0xff]
    %v37 = vstv %s34
    %v38 = vsub.f32 %v37, %v35
    %v39 = vadd.f32 %v38, %v36
    %v40 = vmax.f32 %v39, 0.0
    %s41 = sadd.s32 0, 0
    %v42 = vlaneseq
    %v43 = vshrl.u32 %v42, 7
    %v44 = vstv %s41
    %v45 = vadd.s32 %v44, %v43
    %vm46 = vcmp.lt.s32.totalorder %v45, 1
    %v48 = vlaneseq
    %v49 = vshrl.u32 %v48, 7
    %v50 = vsub.s32 0, %v49
    %v51 = vrot.slane %v40, %v50
    %v52 = vlaneseq
    %v53 = vshrl.u32 %v52, 7
    %v54 = vsub.s32 1, %v53
    %v55 = vrot.slane %v40, %v54
    %v56 = vlaneseq
    %v57 = vshrl.u32 %v56, 7
    %v58 = vsub.s32 2, %v57
    %v59 = vrot.slane %v40, %v58
    %v60 = vlaneseq
    %v61 = vshrl.u32 %v60, 7
    %v62 = vsub.s32 3, %v61
    %v63 = vrot.slane %v40, %v62
    %v64 = vlaneseq
    %v65 = vshrl.u32 %v64, 7
    %v66 = vsub.s32 4, %v65
    %v67 = vrot.slane %v40, %v66
    %v68 = vlaneseq
    %v69 = vshrl.u32 %v68, 7
    %v70 = vsub.s32 5, %v69
    %v71 = vrot.slane %v40, %v70
    %v72 = vlaneseq
    %v73 = vshrl.u32 %v72, 7
    %v74 = vsub.s32 6, %v73
    %v75 = vrot.slane %v40, %v74
    %v76 = vlaneseq
    %v77 = vshrl.u32 %v76, 7
    %v78 = vsub.s32 7, %v77
    %v79 = vrot.slane %v40, %v78
    %v88 = vsel %vm46, %v51, 0.0
    %v89 = vsel %vm46, %v55, 0.0
    %v90 = vsel %vm46, %v59, 0.0
    %v91 = vsel %vm46, %v63, 0.0
    %v92 = vsel %vm46, %v67, 0.0
    %v93 = vsel %vm46, %v71, 0.0
    %v94 = vsel %vm46, %v75, 0.0
    %v95 = vsel %vm46, %v79, 0.0
    %v96 = vld [vmem:[#allocation6] sm:$0x1]
    %vm97 = vcmask 1040384
    %v98 = vsel %vm97, %v88, 0.0
    %v99 = vsel %vm97, %v89, 0.0
    %v100 = vadd.f32 %v98, %v99
    %v101 = vsel %vm97, %v90, 0.0
    %v102 = vadd.f32 %v100, %v101
    %v103 = vsel %vm97, %v91, 0.0
    %v104 = vadd.f32 %v102, %v103
    %v105 = vsel %vm97, %v92, 0.0
    %v106 = vadd.f32 %v104, %v105
    %v107 = vsel %vm97, %v93, 0.0
    %v108 = vadd.f32 %v106, %v107
    %v109 = vsel %vm97, %v94, 0.0
    %v110 = vadd.f32 %v108, %v109
    %v111 = vsel %vm97, %v95, 0.0
    %v112 = vadd.f32 %v110, %v111
    %113 = vadd.xlane.f32.xlu0 %v112
    %v114 = vpop.xlane.xlu0 %113
    %v115 = vrot.slane %v114, 4
    %v116 = vadd.f32 %v114, %v115
    %v117 = vrot.slane %v116, 2
    %v118 = vadd.f32 %v116, %v117
    %v119 = vrot.slane %v118, 1
    %v120 = vadd.f32 %v118, %v119
    %s121 = vtos %v120
    %v122 = vstv %s121
    %v123 = vadd.f32 %v96, %v122
    %vm124 = vcmask 0
    %125 = vst.msk [vmem:[#allocation6] sm:$0x1] %vm124, %v123
    // Predicated region
    $region22: #{margin_ranking_loss.1} parent=1 // pred_check
      %p126 = pneg %p28
    $region23: #{margin_ranking_loss.1} parent=1 // pred_check_branch
      %128 = sbr.rel (%p126) target = $region25
    $region24: #{margin_ranking_loss.1} parent=1 // pred_region
      %v129 = vld [vmem:[#allocation6] sm:$0x1]
      %v130 = vmul.f32 %v129, 0.0009765625
      %131 = vst.msk [vmem:[#allocation6] sm:$0x1] %vm124, %v130
    $region25: #{margin_ranking_loss.1} parent=1 // pred_fallthru
      _
    // Predicated region
    $region26: #{margin_ranking_loss.1} parent=1 // pred_check
      _
    $region27: #{margin_ranking_loss.1} parent=1 // pred_check_branch
      %133 = sbr.rel (0) target = $region29
    $region28: #{margin_ranking_loss.1} parent=1 // pred_region
      %s135 = ssub.s32 16, 16
      %136 = vsyncadd [#allocation5], %s135
      %s138 = sshll.u32 [#allocation6], 4
      %s139 = int_to_ptr.vmem [resolvable:$true] %s138
      %141 = dma.vmem_to_hbm [thread:$0]  %s139, 16, %s3, [#allocation5]
    $region29: #{margin_ranking_loss.1} parent=1 // pred_fallthru
      _
    // Predicated region
    $region30: #{margin_ranking_loss.1} parent=1 // pred_check
      _
    $region31: #{margin_ranking_loss.1} parent=1 // pred_check_branch
      %143 = sbr.rel (0) target = $region33
    $region32: #{margin_ranking_loss.1} parent=1 // pred_region
      %144 = dma.done [#allocation5], 16
    $region33: #{margin_ranking_loss.1} parent=1 // pred_fallthru
      _
    %145 = vsyncpa [#allocation4], 1
    %146 = vsyncpa [#allocation5], 1

</llo_original>
